<compile_context>
chip_gen: v6e
topology: v6e:2x2x1
jax: 0.10.0
libtpu: 0.0.40
codegen_flags: <defaults>
</compile_context>

<pallas_src>
import functools

import jax
import jax.numpy as jnp
from jax import lax
from jax.experimental import pallas as pl
from jax.experimental.pallas import tpu as pltpu

NUM_CLASSES = 8      # K  (classifier emits K+1 logits)
EPSILON = 0.1
ALPHA = 0.3


def _round_up(n, m):
    return ((n + m - 1) // m) * m


def _cdiv(a, b):
    return -(-a // b)


def _dro_kplusone_kernel(x_ref, y_ref, w_ref, b_ref, g_ref, out_ref, *, batch, bs):
    """Per-batch-tile kernel.

    x_ref  : (TB, D)        flattened inputs (f32)
    y_ref  : (TB, 1)        int32 labels
    w_ref  : (D, K+1)       classifier weight (resident)
    b_ref  : (1, K+1)       classifier bias   (resident)
    g_ref  : (K+1, K+1)     Gram matrix W^T W (resident)
    out_ref: (8, 128)       lane-dense partial sums for this tile:
                            [0,0]=sum loss_x, [0,1]=sum loss_v, [0,2]=sum dro terms
    """
    TB, _ = x_ref.shape
    Kp1 = w_ref.shape[1]
    K = Kp1 - 1
    f32 = jnp.float32

    x = x_ref[...]
    yv = y_ref[...]                        # (TB, 1) int32
    w = w_ref[...]
    b = b_ref[...]
    G = g_ref[...]

    col = lax.broadcasted_iota(jnp.int32, (TB, Kp1), 1)
    oh = (col == yv).astype(f32)           # one-hot(y) over K+1 (last col always 0)
    id_mask = col < K                      # first K (in-distribution) classes
    last_oh = (col == K).astype(f32)       # one-hot of the OOD class K

    # ---- single streamed matmul: classifier(x) -------------------------------
    logits = jnp.dot(x, w, preferred_element_type=f32) + b          # (TB, K+1)

    # ---- per-sample CE over the first K classes (orig_loss) ------------------
    neg = jnp.float32(-1e30)
    logits_id = jnp.where(id_mask, logits, neg)
    m_id = jnp.max(logits_id, axis=-1, keepdims=True)
    e_id = jnp.exp(logits_id - m_id)                                 # reused below
    se_id = jnp.sum(e_id, axis=-1, keepdims=True)
    lse_id = m_id + jnp.log(se_id)
    tgt_id = jnp.sum(logits * oh, axis=-1, keepdims=True)            # logits[i, y_i]
    orig_loss = lse_id - tgt_id                                       # (TB, 1)

    # ---- analytic gradient via Gram trick (no (TB,D) temporaries) ------------
    p_id = e_id / se_id                        # softmax over K (last col -> 0), no 2nd exp
    g_log = p_id - oh                          # dCE/dlogits, last col exactly 0
    gG = jnp.dot(g_log, G, preferred_element_type=f32)               # == grad_x @ W
    gn = jnp.sqrt(jnp.maximum(jnp.sum(gG * g_log, axis=-1, keepdims=True), 0.0))
    scale = EPSILON / (gn + 1e-8)                                     # (TB, 1)

    # ---- K+1 CE on x (targets y) ----------------------------------------------
    m_f = jnp.max(logits, axis=-1, keepdims=True)
    lse_f = m_f + jnp.log(jnp.sum(jnp.exp(logits - m_f), axis=-1, keepdims=True))
    loss_x = lse_f - tgt_id                                           # (TB, 1)

    # ---- K+1 CE on virtual OOD samples (target = class K) ---------------------
    # logits(virtual) = logits(x) + scale * (grad_x @ W) = logits + scale * gG
    logits_v = logits + scale * gG
    m_v = jnp.max(logits_v, axis=-1, keepdims=True)
    lse_v = m_v + jnp.log(jnp.sum(jnp.exp(logits_v - m_v), axis=-1, keepdims=True))
    tgt_v = jnp.sum(logits_v * last_oh, axis=-1, keepdims=True)
    loss_v = lse_v - tgt_v                                            # (TB, 1)

    # ---- masks: valid rows (< batch) and virtual subset rows (< batch//2) -----
    row = pl.program_id(0) * TB + lax.broadcasted_iota(jnp.int32, (TB, 1), 0)
    valid = (row < batch).astype(f32)
    vmask = (row < bs).astype(f32)

    s_lx = jnp.sum(loss_x * valid, keepdims=True)                     # (1, 1)
    s_lv = jnp.sum(loss_v * vmask, keepdims=True)
    s_dr = jnp.sum((orig_loss + EPSILON * gn) * valid, keepdims=True)

    # ---- lane-dense partial-sum block ------------------------------------------
    srow = lax.broadcasted_iota(jnp.int32, (8, 128), 0)
    lane = lax.broadcasted_iota(jnp.int32, (8, 128), 1)
    first = srow == 0
    out_ref[...] = (((first & (lane == 0)).astype(f32) * s_lx)
                    + ((first & (lane == 1)).astype(f32) * s_lv)
                    + ((first & (lane == 2)).astype(f32) * s_dr))


def dro_kplusone_forward(x_nchw, y, w, b):
    """JAX wrapper: flatten/pad glue, Gram precompute, batch-tiled pallas_call."""
    B = int(x_nchw.shape[0])
    D = 1
    for s in x_nchw.shape[1:]:
        D *= int(s)
    Kp1 = int(w.shape[1])
    Bs = B // 2                                   # subset_size = min(B // 2, B)

    x_flat = x_nchw.reshape(B, D).astype(jnp.float32)
    y_col = y.astype(jnp.int32).reshape(B, 1)
    w_f = w.astype(jnp.float32)
    b_row = b.reshape(1, Kp1).astype(jnp.float32)
    gram = jnp.dot(w_f.T, w_f)                    # (K+1, K+1), computed once in XLA

    # ---- per-generation VMEM budget (query the chip, don't hard-code) ---------
    try:
        vmem_cap = int(pltpu.get_tpu_info().vmem_capacity_bytes)
    except Exception:
        vmem_cap = 64 * 1024 * 1024               # conservative (v7x-sized) fallback
    tile_budget = int(vmem_cap * 0.70)            # ~45 MiB on v7x, ~90 MiB on v5e/v6e
    vmem_limit = int(vmem_cap * 0.85)             # explicit limit (mandatory on v5e)

    # Resident blocks at their REAL lane-padded footprints, double-buffered
    # (constant index_map, but BlockSpec still allocates two buffers by default).
    D8 = _round_up(D, 8)
    D128 = _round_up(D, 128)
    w_bytes = 2 * (D8 * 128 * 4)                  # (D, K+1) f32, lanes padded 9 -> 128
    b_bytes = 2 * (8 * 128 * 4)
    g_bytes = 2 * (16 * 128 * 4)
    out_bytes = 2 * (8 * 128 * 4)
    const_bytes = w_bytes + b_bytes + g_bytes + out_bytes

    x_row_bytes = D128 * 4                        # one row of one x buffer
    y_row_bytes = 128 * 4                         # (TB, 1) int32, lane-padded
    row_bytes = 2 * (x_row_bytes + y_row_bytes)   # double-buffered x + y

    x_budget = max(tile_budget - const_bytes, 8 * row_bytes)
    rows_fit = max(8, ((x_budget // row_bytes) // 8) * 8)

    # Batch tile: as large as the budget allows, but never larger than the batch.
    TB = min(rows_fit, _round_up(B, 8))
    # Prefer >=4 grid blocks (>=2 per v7x TensorCore + real input double-buffering),
    # but never shrink an x buffer below ~1 MiB just to add blocks.
    rows_4blk = max(8, _round_up(_cdiv(B, 4), 8))
    rows_1mib = max(8, (((1 << 20) // x_row_bytes) // 8) * 8)
    if rows_4blk < TB:
        TB = max(rows_4blk, min(rows_1mib, TB))

    B_pad = _round_up(B, TB)
    nblk = B_pad // TB
    if B_pad != B:
        x_flat = jnp.pad(x_flat, ((0, B_pad - B), (0, 0)))
        y_col = jnp.pad(y_col, ((0, B_pad - B), (0, 0)))

    kernel = functools.partial(_dro_kplusone_kernel, batch=B, bs=Bs)

    cost = pl.CostEstimate(
        flops=int(2 * B_pad * D * Kp1 + 8 * B_pad * Kp1 * Kp1),
        transcendentals=int(4 * B_pad * Kp1),
        bytes_accessed=int(4 * (B_pad * D + D * Kp1 + B_pad
                                + Kp1 * (Kp1 + 1) + 8 * 128 * nblk)),
    )

    partials = pl.pallas_call(
        kernel,
        out_shape=jax.ShapeDtypeStruct((8 * nblk, 128), jnp.float32),
        grid=(nblk,),
        in_specs=[
            pl.BlockSpec((TB, D), lambda i: (i, 0)),        # x tile (streamed)
            pl.BlockSpec((TB, 1), lambda i: (i, 0)),        # labels tile
            pl.BlockSpec((D, Kp1), lambda i: (0, 0)),       # W (resident)
            pl.BlockSpec((1, Kp1), lambda i: (0, 0)),       # b (resident)
            pl.BlockSpec((Kp1, Kp1), lambda i: (0, 0)),     # Gram (resident)
        ],
        out_specs=pl.BlockSpec((8, 128), lambda i: (i, 0)),
        compiler_params=pltpu.CompilerParams(
            dimension_semantics=("parallel",),              # shard blocks across TCs (v7x)
            vmem_limit_bytes=vmem_limit,                    # per-generation scoped limit
        ),
        cost_estimate=cost,
    )(x_flat, y_col, w_f, b_row, gram)

    sums = jnp.sum(partials, axis=0)                        # (128,)
    k_plus_one_loss = (sums[0] + sums[1]) / jnp.float32(B + Bs)
    dro_reg = sums[2] / jnp.float32(B)
    return k_plus_one_loss + ALPHA * dro_reg


def _reference(x_nchw, y, w, b):
    """Pure-JAX reference (uses jax.grad, mirrors the PyTorch forward)."""
    B = x_nchw.shape[0]
    x = x_nchw.reshape(B, -1).astype(jnp.float32)
    Kp1 = w.shape[1]
    K = Kp1 - 1

    def ce_id_sum(xx):
        lg = (xx @ w + b.reshape(1, -1))[:, :K]
        ls = jax.nn.log_softmax(lg, axis=-1)
        per = -ls[jnp.arange(B), y]
        return jnp.sum(per), per

    (_, orig_loss), grads = jax.value_and_grad(ce_id_sum, has_aux=True)(x)
    gn = jnp.linalg.norm(grads.reshape(B, -1), axis=1)
    virtual = x + EPSILON * grads / (gn[:, None] + 1e-8)

    Bs = B // 2
    x_comb = jnp.concatenate([x, virtual[:Bs]], axis=0)
    y_comb = jnp.concatenate([y, jnp.full((Bs,), K, dtype=y.dtype)], axis=0)
    lg_c = x_comb @ w + b.reshape(1, -1)
    ls_c = jax.nn.log_softmax(lg_c, axis=-1)
    kpl = -jnp.mean(ls_c[jnp.arange(B + Bs), y_comb])
    dro = jnp.mean(orig_loss + EPSILON * gn)
    return kpl + ALPHA * dro


if __name__ == "__main__":
    key = jax.random.PRNGKey(0)
    kx, ky, kw = jax.random.split(key, 3)

    B, C, H, W = 2, 4, 16, 16
    D = C * H * W
    K = NUM_CLASSES

    x = jax.random.normal(kx, (B, C, H, W), dtype=jnp.float32)
    y = jax.random.randint(ky, (B,), 0, K, dtype=jnp.int32)

    # deterministic classifier parameters (linear head, K+1 outputs)
    w = 0.02 * jax.random.normal(kw, (D, K + 1), dtype=jnp.float32)
    b = jnp.zeros((K + 1,), dtype=jnp.float32)

    loss = jax.block_until_ready(dro_kplusone_forward(x, y, w, b))
    ref = jax.block_until_ready(_reference(x, y, w, b))
    assert jnp.allclose(loss, ref, rtol=1e-4, atol=1e-4), (loss, ref)

    print("KERNEL_OK")
</pallas_src>

<mosaic_0001>
module attributes {stable_mosaic.version = 11 : i64} {
  func.func @_dro_kplusone_kernel(%arg0: i32, %arg1: memref<8x1024xf32, #tpu.memory_space<vmem>>, %arg2: memref<8x1xi32, #tpu.memory_space<vmem>>, %arg3: memref<1024x9xf32, #tpu.memory_space<vmem>>, %arg4: memref<1x9xf32, #tpu.memory_space<vmem>>, %arg5: memref<9x9xf32, #tpu.memory_space<vmem>>, %arg6: memref<8x128xf32, #tpu.memory_space<vmem>>) attributes {dimension_semantics = [#tpu.dimension_semantics<parallel>], iteration_bounds = array<i64: 1>, scalar_prefetch = 0 : i64, scratch_operands = 0 : i64, tpu.core_type = #tpu.core_type<tc>, window_params = [{transform_indices = @transform_0, window_bounds = array<i64: 8, 1024>}, {transform_indices = @transform_1, window_bounds = array<i64: 8, 1>}, {pipeline_mode = #tpu.pipeline_mode<synchronous>, transform_indices = @transform_2, window_bounds = array<i64: 1024, 9>}, {pipeline_mode = #tpu.pipeline_mode<synchronous>, transform_indices = @transform_3, window_bounds = array<i64: 1, 9>}, {pipeline_mode = #tpu.pipeline_mode<synchronous>, transform_indices = @transform_4, window_bounds = array<i64: 9, 9>}, {transform_indices = @transform_5, window_bounds = array<i64: 8, 128>}]} {
    %c0 = arith.constant 0 : index
    %c0_0 = arith.constant 0 : index
    %0 = vector.load %arg1[%c0, %c0_0] : memref<8x1024xf32, #tpu.memory_space<vmem>>, vector<8x1024xf32>
    %c0_1 = arith.constant 0 : index
    %c0_2 = arith.constant 0 : index
    %1 = vector.load %arg2[%c0_1, %c0_2] : memref<8x1xi32, #tpu.memory_space<vmem>>, vector<8x1xi32>
    %c0_3 = arith.constant 0 : index
    %c0_4 = arith.constant 0 : index
    %2 = vector.load %arg3[%c0_3, %c0_4] : memref<1024x9xf32, #tpu.memory_space<vmem>>, vector<1024x9xf32>
    %c0_5 = arith.constant 0 : index
    %c0_6 = arith.constant 0 : index
    %3 = vector.load %arg4[%c0_5, %c0_6] : memref<1x9xf32, #tpu.memory_space<vmem>>, vector<1x9xf32>
    %c0_7 = arith.constant 0 : index
    %c0_8 = arith.constant 0 : index
    %4 = vector.load %arg5[%c0_7, %c0_8] : memref<9x9xf32, #tpu.memory_space<vmem>>, vector<9x9xf32>
    %5 = tpu.iota {dimensions = array<i32: 1>} : vector<8x9xi32>
    %6 = vector.broadcast %1 : vector<8x1xi32> to vector<8x9xi32>
    %7 = arith.cmpi eq, %5, %6 : vector<8x9xi32>
    %8 = arith.extui %7 : vector<8x9xi1> to vector<8x9xi32>
    %9 = arith.sitofp %8 : vector<8x9xi32> to vector<8x9xf32>
    %c8_i32 = arith.constant 8 : i32
    %10 = vector.broadcast %c8_i32 : i32 to vector<8x9xi32>
    %11 = arith.cmpi slt, %5, %10 : vector<8x9xi32>
    %c8_i32_9 = arith.constant 8 : i32
    %12 = vector.broadcast %c8_i32_9 : i32 to vector<8x9xi32>
    %13 = arith.cmpi eq, %5, %12 : vector<8x9xi32>
    %14 = arith.extui %13 : vector<8x9xi1> to vector<8x9xi32>
    %15 = arith.sitofp %14 : vector<8x9xi32> to vector<8x9xf32>
    %cst = arith.constant dense<0.000000e+00> : vector<8x9xf32>
    %16 = tpu.matmul %0, %2, %cst {dimension_numbers = #tpu.dot_dimension_numbers<[1], [0], [0], [1], [0, 0, 1, 1], [], []>} : vector<8x1024xf32>, vector<1024x9xf32>, vector<8x9xf32> -> vector<8x9xf32>
    %17 = vector.broadcast %3 : vector<1x9xf32> to vector<8x9xf32>
    %18 = arith.addf %16, %17 : vector<8x9xf32>
    %cst_10 = arith.constant -1.000000e+30 : f32
    %19 = vector.broadcast %cst_10 : f32 to vector<8x9xf32>
    %20 = arith.select %11, %18, %19 : vector<8x9xi1>, vector<8x9xf32>
    %cst_11 = arith.constant dense<0xFF800000> : vector<8xf32>
    %21 = vector.multi_reduction <maximumf>, %20, %cst_11 [1] : vector<8x9xf32> to vector<8xf32>
    %22 = vector.shape_cast %21 : vector<8xf32> to vector<8x1xf32>
    %23 = vector.broadcast %22 : vector<8x1xf32> to vector<8x9xf32>
    %24 = arith.subf %20, %23 : vector<8x9xf32>
    %25 = math.exp %24 : vector<8x9xf32>
    %cst_12 = arith.constant dense<0.000000e+00> : vector<8xf32>
    %26 = vector.multi_reduction <add>, %25, %cst_12 [1] : vector<8x9xf32> to vector<8xf32>
    %27 = vector.shape_cast %26 : vector<8xf32> to vector<8x1xf32>
    %28 = math.log %27 : vector<8x1xf32>
    %29 = arith.addf %22, %28 : vector<8x1xf32>
    %30 = arith.mulf %18, %9 : vector<8x9xf32>
    %cst_13 = arith.constant dense<0.000000e+00> : vector<8xf32>
    %31 = vector.multi_reduction <add>, %30, %cst_13 [1] : vector<8x9xf32> to vector<8xf32>
    %32 = vector.shape_cast %31 : vector<8xf32> to vector<8x1xf32>
    %33 = arith.subf %29, %32 : vector<8x1xf32>
    %34 = vector.broadcast %27 : vector<8x1xf32> to vector<8x9xf32>
    %35 = arith.divf %25, %34 : vector<8x9xf32>
    %36 = arith.subf %35, %9 : vector<8x9xf32>
    %cst_14 = arith.constant dense<0.000000e+00> : vector<8x9xf32>
    %37 = tpu.matmul %36, %4, %cst_14 {dimension_numbers = #tpu.dot_dimension_numbers<[1], [0], [0], [1], [0, 0, 1, 1], [], []>} : vector<8x9xf32>, vector<9x9xf32>, vector<8x9xf32> -> vector<8x9xf32>
    %38 = arith.mulf %37, %36 : vector<8x9xf32>
    %cst_15 = arith.constant dense<0.000000e+00> : vector<8xf32>
    %39 = vector.multi_reduction <add>, %38, %cst_15 [1] : vector<8x9xf32> to vector<8xf32>
    %40 = vector.shape_cast %39 : vector<8xf32> to vector<8x1xf32>
    %cst_16 = arith.constant 0.000000e+00 : f32
    %41 = vector.broadcast %cst_16 : f32 to vector<8x1xf32>
    %42 = arith.maximumf %40, %41 : vector<8x1xf32>
    %43 = math.sqrt %42 : vector<8x1xf32>
    %cst_17 = arith.constant 9.99999993E-9 : f32
    %44 = vector.broadcast %cst_17 : f32 to vector<8x1xf32>
    %45 = arith.addf %43, %44 : vector<8x1xf32>
    %cst_18 = arith.constant 1.000000e-01 : f32
    %46 = vector.broadcast %cst_18 : f32 to vector<8x1xf32>
    %47 = arith.divf %46, %45 : vector<8x1xf32>
    %cst_19 = arith.constant dense<0xFF800000> : vector<8xf32>
    %48 = vector.multi_reduction <maximumf>, %18, %cst_19 [1] : vector<8x9xf32> to vector<8xf32>
    %49 = vector.shape_cast %48 : vector<8xf32> to vector<8x1xf32>
    %50 = vector.broadcast %49 : vector<8x1xf32> to vector<8x9xf32>
    %51 = arith.subf %18, %50 : vector<8x9xf32>
    %52 = math.exp %51 : vector<8x9xf32>
    %cst_20 = arith.constant dense<0.000000e+00> : vector<8xf32>
    %53 = vector.multi_reduction <add>, %52, %cst_20 [1] : vector<8x9xf32> to vector<8xf32>
    %54 = vector.shape_cast %53 : vector<8xf32> to vector<8x1xf32>
    %55 = math.log %54 : vector<8x1xf32>
    %56 = arith.addf %49, %55 : vector<8x1xf32>
    %57 = arith.subf %56, %32 : vector<8x1xf32>
    %58 = vector.broadcast %47 : vector<8x1xf32> to vector<8x9xf32>
    %59 = arith.mulf %58, %37 : vector<8x9xf32>
    %60 = arith.addf %18, %59 : vector<8x9xf32>
    %cst_21 = arith.constant dense<0xFF800000> : vector<8xf32>
    %61 = vector.multi_reduction <maximumf>, %60, %cst_21 [1] : vector<8x9xf32> to vector<8xf32>
    %62 = vector.shape_cast %61 : vector<8xf32> to vector<8x1xf32>
    %63 = vector.broadcast %62 : vector<8x1xf32> to vector<8x9xf32>
    %64 = arith.subf %60, %63 : vector<8x9xf32>
    %65 = math.exp %64 : vector<8x9xf32>
    %cst_22 = arith.constant dense<0.000000e+00> : vector<8xf32>
    %66 = vector.multi_reduction <add>, %65, %cst_22 [1] : vector<8x9xf32> to vector<8xf32>
    %67 = vector.shape_cast %66 : vector<8xf32> to vector<8x1xf32>
    %68 = math.log %67 : vector<8x1xf32>
    %69 = arith.addf %62, %68 : vector<8x1xf32>
    %70 = arith.mulf %60, %15 : vector<8x9xf32>
    %cst_23 = arith.constant dense<0.000000e+00> : vector<8xf32>
    %71 = vector.multi_reduction <add>, %70, %cst_23 [1] : vector<8x9xf32> to vector<8xf32>
    %72 = vector.shape_cast %71 : vector<8xf32> to vector<8x1xf32>
    %73 = arith.subf %69, %72 : vector<8x1xf32>
    %c8_i32_24 = arith.constant 8 : i32
    %74 = arith.muli %arg0, %c8_i32_24 : i32
    %75 = tpu.iota {dimensions = array<i32: 0>} : vector<8x1xi32>
    %76 = vector.broadcast %74 : i32 to vector<8x1xi32>
    %77 = arith.addi %76, %75 : vector<8x1xi32>
    %c2_i32 = arith.constant 2 : i32
    %78 = vector.broadcast %c2_i32 : i32 to vector<8x1xi32>
    %79 = arith.cmpi slt, %77, %78 : vector<8x1xi32>
    %80 = arith.extui %79 : vector<8x1xi1> to vector<8x1xi32>
    %81 = arith.sitofp %80 : vector<8x1xi32> to vector<8x1xf32>
    %c1_i32 = arith.constant 1 : i32
    %82 = vector.broadcast %c1_i32 : i32 to vector<8x1xi32>
    %83 = arith.cmpi slt, %77, %82 : vector<8x1xi32>
    %84 = arith.extui %83 : vector<8x1xi1> to vector<8x1xi32>
    %85 = arith.sitofp %84 : vector<8x1xi32> to vector<8x1xf32>
    %86 = arith.mulf %57, %81 : vector<8x1xf32>
    %87 = vector.shape_cast %86 : vector<8x1xf32> to vector<1x8x1xf32>
    %cst_25 = arith.constant dense<0.000000e+00> : vector<1xf32>
    %88 = vector.multi_reduction <add>, %87, %cst_25 [1, 2] : vector<1x8x1xf32> to vector<1xf32>
    %89 = vector.shape_cast %88 : vector<1xf32> to vector<1x1x1xf32>
    %90 = vector.extract %89[0, 0, 0] : f32 from vector<1x1x1xf32>
    %91 = vector.broadcast %90 : f32 to vector<1x1xf32>
    %92 = arith.mulf %73, %85 : vector<8x1xf32>
    %93 = vector.shape_cast %92 : vector<8x1xf32> to vector<1x8x1xf32>
    %cst_26 = arith.constant dense<0.000000e+00> : vector<1xf32>
    %94 = vector.multi_reduction <add>, %93, %cst_26 [1, 2] : vector<1x8x1xf32> to vector<1xf32>
    %95 = vector.shape_cast %94 : vector<1xf32> to vector<1x1x1xf32>
    %96 = vector.extract %95[0, 0, 0] : f32 from vector<1x1x1xf32>
    %97 = vector.broadcast %96 : f32 to vector<1x1xf32>
    %cst_27 = arith.constant 1.000000e-01 : f32
    %98 = vector.broadcast %cst_27 : f32 to vector<8x1xf32>
    %99 = arith.mulf %98, %43 : vector<8x1xf32>
    %100 = arith.addf %33, %99 : vector<8x1xf32>
    %101 = arith.mulf %100, %81 : vector<8x1xf32>
    %102 = vector.shape_cast %101 : vector<8x1xf32> to vector<1x8x1xf32>
    %cst_28 = arith.constant dense<0.000000e+00> : vector<1xf32>
    %103 = vector.multi_reduction <add>, %102, %cst_28 [1, 2] : vector<1x8x1xf32> to vector<1xf32>
    %104 = vector.shape_cast %103 : vector<1xf32> to vector<1x1x1xf32>
    %105 = vector.extract %104[0, 0, 0] : f32 from vector<1x1x1xf32>
    %106 = vector.broadcast %105 : f32 to vector<1x1xf32>
    %107 = tpu.iota {dimensions = array<i32: 0>} : vector<8x128xi32>
    %108 = tpu.iota {dimensions = array<i32: 1>} : vector<8x128xi32>
    %c0_i32 = arith.constant 0 : i32
    %109 = vector.broadcast %c0_i32 : i32 to vector<8x128xi32>
    %110 = arith.cmpi eq, %107, %109 : vector<8x128xi32>
    %c0_i32_29 = arith.constant 0 : i32
    %111 = vector.broadcast %c0_i32_29 : i32 to vector<8x128xi32>
    %112 = arith.cmpi eq, %108, %111 : vector<8x128xi32>
    %113 = arith.andi %110, %112 : vector<8x128xi1>
    %114 = arith.extui %113 : vector<8x128xi1> to vector<8x128xi32>
    %115 = arith.sitofp %114 : vector<8x128xi32> to vector<8x128xf32>
    %116 = vector.broadcast %91 : vector<1x1xf32> to vector<8x128xf32>
    %117 = arith.mulf %115, %116 : vector<8x128xf32>
    %c1_i32_30 = arith.constant 1 : i32
    %118 = vector.broadcast %c1_i32_30 : i32 to vector<8x128xi32>
    %119 = arith.cmpi eq, %108, %118 : vector<8x128xi32>
    %120 = arith.andi %110, %119 : vector<8x128xi1>
    %121 = arith.extui %120 : vector<8x128xi1> to vector<8x128xi32>
    %122 = arith.sitofp %121 : vector<8x128xi32> to vector<8x128xf32>
    %123 = vector.broadcast %97 : vector<1x1xf32> to vector<8x128xf32>
    %124 = arith.mulf %122, %123 : vector<8x128xf32>
    %125 = arith.addf %117, %124 : vector<8x128xf32>
    %c2_i32_31 = arith.constant 2 : i32
    %126 = vector.broadcast %c2_i32_31 : i32 to vector<8x128xi32>
    %127 = arith.cmpi eq, %108, %126 : vector<8x128xi32>
    %128 = arith.andi %110, %127 : vector<8x128xi1>
    %129 = arith.extui %128 : vector<8x128xi1> to vector<8x128xi32>
    %130 = arith.sitofp %129 : vector<8x128xi32> to vector<8x128xf32>
    %131 = vector.broadcast %106 : vector<1x1xf32> to vector<8x128xf32>
    %132 = arith.mulf %130, %131 : vector<8x128xf32>
    %133 = arith.addf %125, %132 : vector<8x128xf32>
    %c0_32 = arith.constant 0 : index
    %c0_33 = arith.constant 0 : index
    %134 = vector.load %arg6[%c0_32, %c0_33] : memref<8x128xf32, #tpu.memory_space<vmem>>, vector<8x128xf32>
    tpu.vector_store %arg6[%c0_32, %c0_33], %133 {strides = array<i32>} : memref<8x128xf32, #tpu.memory_space<vmem>>, vector<8x128xf32>,
    return
  }
  func.func @transform_0(%arg0: i32) -> (i32, i32) {
    %c0_i32 = arith.constant 0 : i32
    %c0_i32_0 = arith.constant 0 : i32
    return %arg0, %c0_i32 : i32, i32
  }
  func.func @transform_1(%arg0: i32) -> (i32, i32) {
    %c0_i32 = arith.constant 0 : i32
    %c0_i32_0 = arith.constant 0 : i32
    return %arg0, %c0_i32 : i32, i32
  }
  func.func @transform_2(%arg0: i32) -> (i32, i32) {
    %c0_i32 = arith.constant 0 : i32
    %c0_i32_0 = arith.constant 0 : i32
    %c0_i32_1 = arith.constant 0 : i32
    return %c0_i32, %c0_i32_0 : i32, i32
  }
  func.func @transform_3(%arg0: i32) -> (i32, i32) {
    %c0_i32 = arith.constant 0 : i32
    %c0_i32_0 = arith.constant 0 : i32
    %c0_i32_1 = arith.constant 0 : i32
    return %c0_i32, %c0_i32_0 : i32, i32
  }
  func.func @transform_4(%arg0: i32) -> (i32, i32) {
    %c0_i32 = arith.constant 0 : i32
    %c0_i32_0 = arith.constant 0 : i32
    %c0_i32_1 = arith.constant 0 : i32
    return %c0_i32, %c0_i32_0 : i32, i32
  }
  func.func @transform_5(%arg0: i32) -> (i32, i32) {
    %c0_i32 = arith.constant 0 : i32
    %c0_i32_0 = arith.constant 0 : i32
    return %arg0, %c0_i32 : i32, i32
  }
}

</mosaic_0001>

<llo_original>
// kernel: tpu_custom_call.1
$region0: #{tpu_custom_call.1}
  #allocation0 [shape = 'u32[]', space=smem, size = 0x4, offset = 0x4, fixed_abs, tag = 'smem constant byte address 0x4 - core index']
  #allocation1 [shape = 'u32[144,128]{1,0:T(1,128)}', space=vmem, size = 0x12000, scoped, tag = 'internal scratch']
  %s0 = inlined_call_operand.vmem [shape: f32[8,1024], index: 0, kind: input, shape index: {}]
  %s1 = inlined_call_operand.vmem [shape: s32[8,1], index: 1, kind: input, shape index: {}]
  %s2 = inlined_call_operand.vmem [shape: f32[1024,9], index: 2, kind: input, shape index: {}]
  %s3 = inlined_call_operand.vmem [shape: f32[1,9], index: 3, kind: input, shape index: {}]
  %s4 = inlined_call_operand.vmem [shape: f32[9,9], index: 4, kind: input, shape index: {}]
  %s5 = inlined_call_operand.hbm [shape: f32[8,128], index: 5, kind: output, shape index: {}]
  %s6 = sld [smem:[#allocation0]]
  $region30: #{tpu_custom_call.1} parent=0
    _
  %s8 = ssub.s32 1, %s6
  %s9 = scalar_select 0, %s8, %s6
  $region1: #{tpu_custom_call.1} parent=0
    #allocation2 [shape = 'u8[4096]{0}', space=vmem, size = 0x1000, scoped, tag = 'output window, operand 0, single buffered']
    #allocation3 [shape = 's32[1]{0}', space=sflag, size = 0x4, scoped, tag = 'scoped memory for tpu_custom_call.1']
    %10 = vsyncpa [#allocation3], 0
    // Predicated region
    $region2: #{tpu_custom_call.1} parent=1 // pred_check
      _
    $region3: #{tpu_custom_call.1} parent=1 // pred_check_branch
      %12 = sbr.rel (0) target = $region5
    $region4: #{tpu_custom_call.1} parent=1 // pred_region
      _
    $region5: #{tpu_custom_call.1} parent=1 // pred_fallthru
      _
    // Predicated region
    $region6: #{tpu_custom_call.1} parent=1 // pred_check
      _
    $region7: #{tpu_custom_call.1} parent=1 // pred_check_branch
      %14 = sbr.rel (0) target = $region9
    $region8: #{tpu_custom_call.1} parent=1 // pred_region
      _
    $region9: #{tpu_custom_call.1} parent=1 // pred_fallthru
      _
    // Predicated region
    $region10: #{tpu_custom_call.1} parent=1 // pred_check
      _
    $region11: #{tpu_custom_call.1} parent=1 // pred_check_branch
      %16 = sbr.rel (0) target = $region13
    $region12: #{tpu_custom_call.1} parent=1 // pred_region
      _
    $region13: #{tpu_custom_call.1} parent=1 // pred_fallthru
      _
    // Predicated region
    $region14: #{tpu_custom_call.1} parent=1 // pred_check
      _
    $region15: #{tpu_custom_call.1} parent=1 // pred_check_branch
      %18 = sbr.rel (0) target = $region17
    $region16: #{tpu_custom_call.1} parent=1 // pred_region
      _
    $region17: #{tpu_custom_call.1} parent=1 // pred_fallthru
      _
    // Predicated region
    $region18: #{tpu_custom_call.1} parent=1 // pred_check
      _
    $region19: #{tpu_custom_call.1} parent=1 // pred_check_branch
      %20 = sbr.rel (0) target = $region21
    $region20: #{tpu_custom_call.1} parent=1 // pred_region
      _
    $region21: #{tpu_custom_call.1} parent=1 // pred_fallthru
      _
    %v21 = vld [vmem:[%s0] sm:$0xff]
    %v22 = vld [vmem:[%s0 + $0x8] sm:$0xff]
    %v23 = vld [vmem:[%s0 + $0x10] sm:$0xff]
    %v24 = vld [vmem:[%s0 + $0x18] sm:$0xff]
    %v25 = vld [vmem:[%s0 + $0x20] sm:$0xff]
    %v26 = vld [vmem:[%s0 + $0x28] sm:$0xff]
    %v27 = vld [vmem:[%s0 + $0x30] sm:$0xff]
    %v28 = vld [vmem:[%s0 + $0x38] sm:$0xff]
    %v29 = vld [vmem:[%s1] sm:$0xff]
    %v30 = vld [vmem:[%s2] sm:$0xff]
    %v31 = vld [vmem:[%s2 + $0x8] sm:$0xff]
    %v32 = vld [vmem:[%s2 + $0x10] sm:$0xff]
    %v33 = vld [vmem:[%s2 + $0x18] sm:$0xff]
    %v34 = vld [vmem:[%s2 + $0x20] sm:$0xff]
    %v35 = vld [vmem:[%s2 + $0x28] sm:$0xff]
    %v36 = vld [vmem:[%s2 + $0x30] sm:$0xff]
    %v37 = vld [vmem:[%s2 + $0x38] sm:$0xff]
    %v38 = vld [vmem:[%s2 + $0x40] sm:$0xff]
    %v39 = vld [vmem:[%s2 + $0x48] sm:$0xff]
    %v40 = vld [vmem:[%s2 + $0x50] sm:$0xff]
    %v41 = vld [vmem:[%s2 + $0x58] sm:$0xff]
    %v42 = vld [vmem:[%s2 + $0x60] sm:$0xff]
    %v43 = vld [vmem:[%s2 + $0x68] sm:$0xff]
    %v44 = vld [vmem:[%s2 + $0x70] sm:$0xff]
    %v45 = vld [vmem:[%s2 + $0x78] sm:$0xff]
    %v46 = vld [vmem:[%s2 + $0x80] sm:$0xff]
    %v47 = vld [vmem:[%s2 + $0x88] sm:$0xff]
    %v48 = vld [vmem:[%s2 + $0x90] sm:$0xff]
    %v49 = vld [vmem:[%s2 + $0x98] sm:$0xff]
    %v50 = vld [vmem:[%s2 + $0xa0] sm:$0xff]
    %v51 = vld [vmem:[%s2 + $0xa8] sm:$0xff]
    %v52 = vld [vmem:[%s2 + $0xb0] sm:$0xff]
    %v53 = vld [vmem:[%s2 + $0xb8] sm:$0xff]
    %v54 = vld [vmem:[%s2 + $0xc0] sm:$0xff]
    %v55 = vld [vmem:[%s2 + $0xc8] sm:$0xff]
    %v56 = vld [vmem:[%s2 + $0xd0] sm:$0xff]
    %v57 = vld [vmem:[%s2 + $0xd8] sm:$0xff]
    %v58 = vld [vmem:[%s2 + $0xe0] sm:$0xff]
    %v59 = vld [vmem:[%s2 + $0xe8] sm:$0xff]
    %v60 = vld [vmem:[%s2 + $0xf0] sm:$0xff]
    %v61 = vld [vmem:[%s2 + $0xf8] sm:$0xff]
    %v62 = vld [vmem:[%s2 + $0x100] sm:$0xff]
    %v63 = vld [vmem:[%s2 + $0x108] sm:$0xff]
    %v64 = vld [vmem:[%s2 + $0x110] sm:$0xff]
    %v65 = vld [vmem:[%s2 + $0x118] sm:$0xff]
    %v66 = vld [vmem:[%s2 + $0x120] sm:$0xff]
    %v67 = vld [vmem:[%s2 + $0x128] sm:$0xff]
    %v68 = vld [vmem:[%s2 + $0x130] sm:$0xff]
    %v69 = vld [vmem:[%s2 + $0x138] sm:$0xff]
    %v70 = vld [vmem:[%s2 + $0x140] sm:$0xff]
    %v71 = vld [vmem:[%s2 + $0x148] sm:$0xff]
    %v72 = vld [vmem:[%s2 + $0x150] sm:$0xff]
    %v73 = vld [vmem:[%s2 + $0x158] sm:$0xff]
    %v74 = vld [vmem:[%s2 + $0x160] sm:$0xff]
    %v75 = vld [vmem:[%s2 + $0x168] sm:$0xff]
    %v76 = vld [vmem:[%s2 + $0x170] sm:$0xff]
    %v77 = vld [vmem:[%s2 + $0x178] sm:$0xff]
    %v78 = vld [vmem:[%s2 + $0x180] sm:$0xff]
    %v79 = vld [vmem:[%s2 + $0x188] sm:$0xff]
    %v80 = vld [vmem:[%s2 + $0x190] sm:$0xff]
    %v81 = vld [vmem:[%s2 + $0x198] sm:$0xff]
    %v82 = vld [vmem:[%s2 + $0x1a0] sm:$0xff]
    %v83 = vld [vmem:[%s2 + $0x1a8] sm:$0xff]
    %v84 = vld [vmem:[%s2 + $0x1b0] sm:$0xff]
    %v85 = vld [vmem:[%s2 + $0x1b8] sm:$0xff]
    %v86 = vld [vmem:[%s2 + $0x1c0] sm:$0xff]
    %v87 = vld [vmem:[%s2 + $0x1c8] sm:$0xff]
    %v88 = vld [vmem:[%s2 + $0x1d0] sm:$0xff]
    %v89 = vld [vmem:[%s2 + $0x1d8] sm:$0xff]
    %v90 = vld [vmem:[%s2 + $0x1e0] sm:$0xff]
    %v91 = vld [vmem:[%s2 + $0x1e8] sm:$0xff]
    %v92 = vld [vmem:[%s2 + $0x1f0] sm:$0xff]
    %v93 = vld [vmem:[%s2 + $0x1f8] sm:$0xff]
    %v94 = vld [vmem:[%s2 + $0x200] sm:$0xff]
    %v95 = vld [vmem:[%s2 + $0x208] sm:$0xff]
    %v96 = vld [vmem:[%s2 + $0x210] sm:$0xff]
    %v97 = vld [vmem:[%s2 + $0x218] sm:$0xff]
    %v98 = vld [vmem:[%s2 + $0x220] sm:$0xff]
    %v99 = vld [vmem:[%s2 + $0x228] sm:$0xff]
    %v100 = vld [vmem:[%s2 + $0x230] sm:$0xff]
    %v101 = vld [vmem:[%s2 + $0x238] sm:$0xff]
    %v102 = vld [vmem:[%s2 + $0x240] sm:$0xff]
    %v103 = vld [vmem:[%s2 + $0x248] sm:$0xff]
    %v104 = vld [vmem:[%s2 + $0x250] sm:$0xff]
    %v105 = vld [vmem:[%s2 + $0x258] sm:$0xff]
    %v106 = vld [vmem:[%s2 + $0x260] sm:$0xff]
    %v107 = vld [vmem:[%s2 + $0x268] sm:$0xff]
    %v108 = vld [vmem:[%s2 + $0x270] sm:$0xff]
    %v109 = vld [vmem:[%s2 + $0x278] sm:$0xff]
    %v110 = vld [vmem:[%s2 + $0x280] sm:$0xff]
    %v111 = vld [vmem:[%s2 + $0x288] sm:$0xff]
    %v112 = vld [vmem:[%s2 + $0x290] sm:$0xff]
    %v113 = vld [vmem:[%s2 + $0x298] sm:$0xff]
    %v114 = vld [vmem:[%s2 + $0x2a0] sm:$0xff]
    %v115 = vld [vmem:[%s2 + $0x2a8] sm:$0xff]
    %v116 = vld [vmem:[%s2 + $0x2b0] sm:$0xff]
    %v117 = vld [vmem:[%s2 + $0x2b8] sm:$0xff]
    %v118 = vld [vmem:[%s2 + $0x2c0] sm:$0xff]
    %v119 = vld [vmem:[%s2 + $0x2c8] sm:$0xff]
    %v120 = vld [vmem:[%s2 + $0x2d0] sm:$0xff]
    %v121 = vld [vmem:[%s2 + $0x2d8] sm:$0xff]
    %v122 = vld [vmem:[%s2 + $0x2e0] sm:$0xff]
    %v123 = vld [vmem:[%s2 + $0x2e8] sm:$0xff]
    %v124 = vld [vmem:[%s2 + $0x2f0] sm:$0xff]
    %v125 = vld [vmem:[%s2 + $0x2f8] sm:$0xff]
    %v126 = vld [vmem:[%s2 + $0x300] sm:$0xff]
    %v127 = vld [vmem:[%s2 + $0x308] sm:$0xff]
    %v128 = vld [vmem:[%s2 + $0x310] sm:$0xff]
    %v129 = vld [vmem:[%s2 + $0x318] sm:$0xff]
    %v130 = vld [vmem:[%s2 + $0x320] sm:$0xff]
    %v131 = vld [vmem:[%s2 + $0x328] sm:$0xff]
    %v132 = vld [vmem:[%s2 + $0x330] sm:$0xff]
    %v133 = vld [vmem:[%s2 + $0x338] sm:$0xff]
    %v134 = vld [vmem:[%s2 + $0x340] sm:$0xff]
    %v135 = vld [vmem:[%s2 + $0x348] sm:$0xff]
    %v136 = vld [vmem:[%s2 + $0x350] sm:$0xff]
    %v137 = vld [vmem:[%s2 + $0x358] sm:$0xff]
    %v138 = vld [vmem:[%s2 + $0x360] sm:$0xff]
    %v139 = vld [vmem:[%s2 + $0x368] sm:$0xff]
    %v140 = vld [vmem:[%s2 + $0x370] sm:$0xff]
    %v141 = vld [vmem:[%s2 + $0x378] sm:$0xff]
    %v142 = vld [vmem:[%s2 + $0x380] sm:$0xff]
    %v143 = vld [vmem:[%s2 + $0x388] sm:$0xff]
    %v144 = vld [vmem:[%s2 + $0x390] sm:$0xff]
    %v145 = vld [vmem:[%s2 + $0x398] sm:$0xff]
    %v146 = vld [vmem:[%s2 + $0x3a0] sm:$0xff]
    %v147 = vld [vmem:[%s2 + $0x3a8] sm:$0xff]
    %v148 = vld [vmem:[%s2 + $0x3b0] sm:$0xff]
    %v149 = vld [vmem:[%s2 + $0x3b8] sm:$0xff]
    %v150 = vld [vmem:[%s2 + $0x3c0] sm:$0xff]
    %v151 = vld [vmem:[%s2 + $0x3c8] sm:$0xff]
    %v152 = vld [vmem:[%s2 + $0x3d0] sm:$0xff]
    %v153 = vld [vmem:[%s2 + $0x3d8] sm:$0xff]
    %v154 = vld [vmem:[%s2 + $0x3e0] sm:$0xff]
    %v155 = vld [vmem:[%s2 + $0x3e8] sm:$0xff]
    %v156 = vld [vmem:[%s2 + $0x3f0] sm:$0xff]
    %v157 = vld [vmem:[%s2 + $0x3f8] sm:$0xff]
    %v158 = vld [vmem:[%s3] sm:$0x1]
    %v159 = vld [vmem:[%s4] sm:$0xff]
    %v160 = vld [vmem:[%s4 + $0x8] sm:$0x1]
    %v161 = vlaneseq
    %v162 = vand.u32 %v161, 127
    %163 = vset.pattern.permute.xlu0 0
    %164 = vperm.xlu0 %163, %v29
    %v165 = vpop.permute.xlu0 %164
    %vm166 = vcmp.eq.s32.totalorder %v162, %v165
    %v167 = vsel %vm166, 1, 0
    %v168 = vcvt.s32.f32 %v167
    %vm169 = vcmp.lt.s32.totalorder %v162, 8
    %vm170 = vcmp.eq.s32.totalorder %v162, 8
    %v171 = vsel %vm170, 1, 0
    %v172 = vcvt.s32.f32 %v171
    %v174 = vlaneseq
    %v175 = vshrl.u32 %v174, 7
    %v176 = vsub.s32 0, %v175
    %v177 = vrot.slane %v158, %v176
    %179 = vmatprep.subr.mxu0 0.0
    %180 = vmatpush1.msra.mxu0 %v45
    %181 = vmatprep.subr.mxu0 0.0
    %182 = vmatpush1.msra.mxu0 %v44
    %183 = vmatprep.subr.mxu0 0.0
    %184 = vmatpush1.msra.mxu0 %v43
    %185 = vmatprep.subr.mxu0 0.0
    %186 = vmatpush1.msra.mxu0 %v42
    %187 = vmatprep.subr.mxu0 0.0
    %188 = vmatpush1.msra.mxu0 %v41
    %189 = vmatprep.subr.mxu0 0.0
    %190 = vmatpush1.msra.mxu0 %v40
    %191 = vmatprep.subr.mxu0 0.0
    %192 = vmatpush1.msra.mxu0 %v39
    %193 = vmatprep.subr.mxu0 0.0
    %194 = vmatpush1.msra.mxu0 %v38
    %195 = vmatprep.subr.mxu0 0.0
    %196 = vmatpush1.msra.mxu0 %v37
    %197 = vmatprep.subr.mxu0 0.0
    %198 = vmatpush1.msra.mxu0 %v36
    %199 = vmatprep.subr.mxu0 0.0
    %200 = vmatpush1.msra.mxu0 %v35
    %201 = vmatprep.subr.mxu0 0.0
    %202 = vmatpush1.msra.mxu0 %v34
    %203 = vmatprep.subr.mxu0 0.0
    %204 = vmatpush1.msra.mxu0 %v33
    %205 = vmatprep.subr.mxu0 0.0
    %206 = vmatpush1.msra.mxu0 %v32
    %207 = vmatprep.subr.mxu0 0.0
    %208 = vmatpush1.msra.mxu0 %v31
    %209 = vmatprep.subr.mxu0 0.0
    %210 = vmatpush1.msra.mxu0 %v30
    %211 = vmatprep.subr.mxu0 0.0
    %212 = vmatpush2.msra.mxu0 %v61
    %213 = vmatprep.subr.mxu0 0.0
    %214 = vmatpush2.msra.mxu0 %v60
    %215 = vmatprep.subr.mxu0 0.0
    %216 = vmatpush2.msra.mxu0 %v59
    %217 = vmatprep.subr.mxu0 0.0
    %218 = vmatpush2.msra.mxu0 %v58
    %219 = vmatprep.subr.mxu0 0.0
    %220 = vmatpush2.msra.mxu0 %v57
    %221 = vmatprep.subr.mxu0 0.0
    %222 = vmatpush2.msra.mxu0 %v56
    %223 = vmatprep.subr.mxu0 0.0
    %224 = vmatpush2.msra.mxu0 %v55
    %225 = vmatprep.subr.mxu0 0.0
    %226 = vmatpush2.msra.mxu0 %v54
    %227 = vmatprep.subr.mxu0 0.0
    %228 = vmatpush2.msra.mxu0 %v53
    %229 = vmatprep.subr.mxu0 0.0
    %230 = vmatpush2.msra.mxu0 %v52
    %231 = vmatprep.subr.mxu0 0.0
    %232 = vmatpush2.msra.mxu0 %v51
    %233 = vmatprep.subr.mxu0 0.0
    %234 = vmatpush2.msra.mxu0 %v50
    %235 = vmatprep.subr.mxu0 0.0
    %236 = vmatpush2.msra.mxu0 %v49
    %237 = vmatprep.subr.mxu0 0.0
    %238 = vmatpush2.msra.mxu0 %v48
    %239 = vmatprep.subr.mxu0 0.0
    %240 = vmatpush2.msra.mxu0 %v47
    %241 = vmatprep.subr.mxu0 0.0
    %242 = vmatpush2.msra.mxu0 %v46
    %243 = vmatprep.mubr.f32.mxu0 %v22
    %244 = vmatmul.mubr.f32.gmra.mxu0 %v21
    %v245 = vpop.f32.mrf.mxu0
    %v246 = vadd.f32 %v177, %v245
    %v247 = vpop.f32.mrf.mxu0
    %248 = vdwg.mxu0
    %249 = vmatprep.subr.mxu0 0.0
    %250 = vmatpush1.msra.mxu0 %v77
    %251 = vmatprep.subr.mxu0 0.0
    %252 = vmatpush1.msra.mxu0 %v76
    %253 = vmatprep.subr.mxu0 0.0
    %254 = vmatpush1.msra.mxu0 %v75
    %255 = vmatprep.subr.mxu0 0.0
    %256 = vmatpush1.msra.mxu0 %v74
    %257 = vmatprep.subr.mxu0 0.0
    %258 = vmatpush1.msra.mxu0 %v73
    %259 = vmatprep.subr.mxu0 0.0
    %260 = vmatpush1.msra.mxu0 %v72
    %261 = vmatprep.subr.mxu0 0.0
    %262 = vmatpush1.msra.mxu0 %v71
    %263 = vmatprep.subr.mxu0 0.0
    %264 = vmatpush1.msra.mxu0 %v70
    %265 = vmatprep.subr.mxu0 0.0
    %266 = vmatpush1.msra.mxu0 %v69
    %267 = vmatprep.subr.mxu0 0.0
    %268 = vmatpush1.msra.mxu0 %v68
    %269 = vmatprep.subr.mxu0 0.0
    %270 = vmatpush1.msra.mxu0 %v67
    %271 = vmatprep.subr.mxu0 0.0
    %272 = vmatpush1.msra.mxu0 %v66
    %273 = vmatprep.subr.mxu0 0.0
    %274 = vmatpush1.msra.mxu0 %v65
    %275 = vmatprep.subr.mxu0 0.0
    %276 = vmatpush1.msra.mxu0 %v64
    %277 = vmatprep.subr.mxu0 0.0
    %278 = vmatpush1.msra.mxu0 %v63
    %279 = vmatprep.subr.mxu0 0.0
    %280 = vmatpush1.msra.mxu0 %v62
    %281 = vmatprep.subr.mxu0 0.0
    %282 = vmatpush2.msra.mxu0 %v93
    %283 = vmatprep.subr.mxu0 0.0
    %284 = vmatpush2.msra.mxu0 %v92
    %285 = vmatprep.subr.mxu0 0.0
    %286 = vmatpush2.msra.mxu0 %v91
    %287 = vmatprep.subr.mxu0 0.0
    %288 = vmatpush2.msra.mxu0 %v90
    %289 = vmatprep.subr.mxu0 0.0
    %290 = vmatpush2.msra.mxu0 %v89
    %291 = vmatprep.subr.mxu0 0.0
    %292 = vmatpush2.msra.mxu0 %v88
    %293 = vmatprep.subr.mxu0 0.0
    %294 = vmatpush2.msra.mxu0 %v87
    %295 = vmatprep.subr.mxu0 0.0
    %296 = vmatpush2.msra.mxu0 %v86
    %297 = vmatprep.subr.mxu0 0.0
    %298 = vmatpush2.msra.mxu0 %v85
    %299 = vmatprep.subr.mxu0 0.0
    %300 = vmatpush2.msra.mxu0 %v84
    %301 = vmatprep.subr.mxu0 0.0
    %302 = vmatpush2.msra.mxu0 %v83
    %303 = vmatprep.subr.mxu0 0.0
    %304 = vmatpush2.msra.mxu0 %v82
    %305 = vmatprep.subr.mxu0 0.0
    %306 = vmatpush2.msra.mxu0 %v81
    %307 = vmatprep.subr.mxu0 0.0
    %308 = vmatpush2.msra.mxu0 %v80
    %309 = vmatprep.subr.mxu0 0.0
    %310 = vmatpush2.msra.mxu0 %v79
    %311 = vmatprep.subr.mxu0 0.0
    %312 = vmatpush2.msra.mxu0 %v78
    %313 = vmatprep.mubr.f32.mxu0 %v24
    %314 = vmatmul.mubr.f32.gmra.mxu0 %v23
    %v315 = vpop.f32.mrf.mxu0
    %v316 = vadd.f32 %v246, %v315
    %v317 = vpop.f32.mrf.mxu0
    %318 = vdwg.mxu0
    %319 = vmatprep.subr.mxu0 0.0
    %320 = vmatpush1.msra.mxu0 %v109
    %321 = vmatprep.subr.mxu0 0.0
    %322 = vmatpush1.msra.mxu0 %v108
    %323 = vmatprep.subr.mxu0 0.0
    %324 = vmatpush1.msra.mxu0 %v107
    %325 = vmatprep.subr.mxu0 0.0
    %326 = vmatpush1.msra.mxu0 %v106
    %327 = vmatprep.subr.mxu0 0.0
    %328 = vmatpush1.msra.mxu0 %v105
    %329 = vmatprep.subr.mxu0 0.0
    %330 = vmatpush1.msra.mxu0 %v104
    %331 = vmatprep.subr.mxu0 0.0
    %332 = vmatpush1.msra.mxu0 %v103
    %333 = vmatprep.subr.mxu0 0.0
    %334 = vmatpush1.msra.mxu0 %v102
    %335 = vmatprep.subr.mxu0 0.0
    %336 = vmatpush1.msra.mxu0 %v101
    %337 = vmatprep.subr.mxu0 0.0
    %338 = vmatpush1.msra.mxu0 %v100
    %339 = vmatprep.subr.mxu0 0.0
    %340 = vmatpush1.msra.mxu0 %v99
    %341 = vmatprep.subr.mxu0 0.0
    %342 = vmatpush1.msra.mxu0 %v98
    %343 = vmatprep.subr.mxu0 0.0
    %344 = vmatpush1.msra.mxu0 %v97
    %345 = vmatprep.subr.mxu0 0.0
    %346 = vmatpush1.msra.mxu0 %v96
    %347 = vmatprep.subr.mxu0 0.0
    %348 = vmatpush1.msra.mxu0 %v95
    %349 = vmatprep.subr.mxu0 0.0
    %350 = vmatpush1.msra.mxu0 %v94
    %351 = vmatprep.subr.mxu0 0.0
    %352 = vmatpush2.msra.mxu0 %v125
    %353 = vmatprep.subr.mxu0 0.0
    %354 = vmatpush2.msra.mxu0 %v124
    %355 = vmatprep.subr.mxu0 0.0
    %356 = vmatpush2.msra.mxu0 %v123
    %357 = vmatprep.subr.mxu0 0.0
    %358 = vmatpush2.msra.mxu0 %v122
    %359 = vmatprep.subr.mxu0 0.0
    %360 = vmatpush2.msra.mxu0 %v121
    %361 = vmatprep.subr.mxu0 0.0
    %362 = vmatpush2.msra.mxu0 %v120
    %363 = vmatprep.subr.mxu0 0.0
    %364 = vmatpush2.msra.mxu0 %v119
    %365 = vmatprep.subr.mxu0 0.0
    %366 = vmatpush2.msra.mxu0 %v118
    %367 = vmatprep.subr.mxu0 0.0
    %368 = vmatpush2.msra.mxu0 %v117
    %369 = vmatprep.subr.mxu0 0.0
    %370 = vmatpush2.msra.mxu0 %v116
    %371 = vmatprep.subr.mxu0 0.0
    %372 = vmatpush2.msra.mxu0 %v115
    %373 = vmatprep.subr.mxu0 0.0
    %374 = vmatpush2.msra.mxu0 %v114
    %375 = vmatprep.subr.mxu0 0.0
    %376 = vmatpush2.msra.mxu0 %v113
    %377 = vmatprep.subr.mxu0 0.0
    %378 = vmatpush2.msra.mxu0 %v112
    %379 = vmatprep.subr.mxu0 0.0
    %380 = vmatpush2.msra.mxu0 %v111
    %381 = vmatprep.subr.mxu0 0.0
    %382 = vmatpush2.msra.mxu0 %v110
    %383 = vmatprep.mubr.f32.mxu0 %v26
    %384 = vmatmul.mubr.f32.gmra.mxu0 %v25
    %v385 = vpop.f32.mrf.mxu0
    %v386 = vadd.f32 %v316, %v385
    %v387 = vpop.f32.mrf.mxu0
    %388 = vdwg.mxu0
    %389 = vmatprep.subr.mxu0 0.0
    %390 = vmatpush1.msra.mxu0 %v141
    %391 = vmatprep.subr.mxu0 0.0
    %392 = vmatpush1.msra.mxu0 %v140
    %393 = vmatprep.subr.mxu0 0.0
    %394 = vmatpush1.msra.mxu0 %v139
    %395 = vmatprep.subr.mxu0 0.0
    %396 = vmatpush1.msra.mxu0 %v138
    %397 = vmatprep.subr.mxu0 0.0
    %398 = vmatpush1.msra.mxu0 %v137
    %399 = vmatprep.subr.mxu0 0.0
    %400 = vmatpush1.msra.mxu0 %v136
    %401 = vmatprep.subr.mxu0 0.0
    %402 = vmatpush1.msra.mxu0 %v135
    %403 = vmatprep.subr.mxu0 0.0
    %404 = vmatpush1.msra.mxu0 %v134
    %405 = vmatprep.subr.mxu0 0.0
    %406 = vmatpush1.msra.mxu0 %v133
    %407 = vmatprep.subr.mxu0 0.0
    %408 = vmatpush1.msra.mxu0 %v132
    %409 = vmatprep.subr.mxu0 0.0
    %410 = vmatpush1.msra.mxu0 %v131
    %411 = vmatprep.subr.mxu0 0.0
    %412 = vmatpush1.msra.mxu0 %v130
    %413 = vmatprep.subr.mxu0 0.0
    %414 = vmatpush1.msra.mxu0 %v129
    %415 = vmatprep.subr.mxu0 0.0
    %416 = vmatpush1.msra.mxu0 %v128
    %417 = vmatprep.subr.mxu0 0.0
    %418 = vmatpush1.msra.mxu0 %v127
    %419 = vmatprep.subr.mxu0 0.0
    %420 = vmatpush1.msra.mxu0 %v126
    %421 = vmatprep.subr.mxu0 0.0
    %422 = vmatpush2.msra.mxu0 %v157
    %423 = vmatprep.subr.mxu0 0.0
    %424 = vmatpush2.msra.mxu0 %v156
    %425 = vmatprep.subr.mxu0 0.0
    %426 = vmatpush2.msra.mxu0 %v155
    %427 = vmatprep.subr.mxu0 0.0
    %428 = vmatpush2.msra.mxu0 %v154
    %429 = vmatprep.subr.mxu0 0.0
    %430 = vmatpush2.msra.mxu0 %v153
    %431 = vmatprep.subr.mxu0 0.0
    %432 = vmatpush2.msra.mxu0 %v152
    %433 = vmatprep.subr.mxu0 0.0
    %434 = vmatpush2.msra.mxu0 %v151
    %435 = vmatprep.subr.mxu0 0.0
    %436 = vmatpush2.msra.mxu0 %v150
    %437 = vmatprep.subr.mxu0 0.0
    %438 = vmatpush2.msra.mxu0 %v149
    %439 = vmatprep.subr.mxu0 0.0
    %440 = vmatpush2.msra.mxu0 %v148
    %441 = vmatprep.subr.mxu0 0.0
    %442 = vmatpush2.msra.mxu0 %v147
    %443 = vmatprep.subr.mxu0 0.0
    %444 = vmatpush2.msra.mxu0 %v146
    %445 = vmatprep.subr.mxu0 0.0
    %446 = vmatpush2.msra.mxu0 %v145
    %447 = vmatprep.subr.mxu0 0.0
    %448 = vmatpush2.msra.mxu0 %v144
    %449 = vmatprep.subr.mxu0 0.0
    %450 = vmatpush2.msra.mxu0 %v143
    %451 = vmatprep.subr.mxu0 0.0
    %452 = vmatpush2.msra.mxu0 %v142
    %453 = vmatprep.mubr.f32.mxu0 %v28
    %454 = vmatmul.mubr.f32.gmra.mxu0 %v27
    %v455 = vpop.f32.mrf.mxu0
    %v456 = vadd.f32 %v386, %v455
    %v457 = vpop.f32.mrf.mxu0
    %458 = vdwg.mxu0
    %v459 = vsel %vm169, %v456, -1e+30
    %vm460 = vcmask 72704
    %v461 = vsel %vm460, %v459, -inf
    %462 = vmax.xlane.f32.xlu0 %v461
    %v463 = vpop.xlane.xlu0 %462
    %v464 = vsub.f32 %v459, %v463
    %v465 = vmul.f32 %v464, 1.442695
    %v466 = vpow.pop %v465
    %v467 = vsel %vm460, %v466, 0.0
    %468 = vadd.xlane.f32.xlu0 %v467
    %v469 = vpop.xlane.xlu0 %468
    %v470 = vlog2.pop %v469
    %v471 = vmul.f32 %v470, 0.6931472
    %v472 = vadd.f32 %v463, %v471
    %v473 = vmul.f32 %v456, %v168
    %v474 = vsel %vm460, %v473, 0.0
    %475 = vadd.xlane.f32.xlu0 %v474
    %v476 = vpop.xlane.xlu0 %475
    %v477 = vsub.f32 %v472, %v476
    %v478 = vrcp.pop %v469
    %v479 = vmul.f32 %v466, %v478
    %v480 = vsub.f32 %v479, %v168
    %v482 = vsel %vm460, %v480, 0
    %vm484 = vcmask 1040384
    %v486 = vsel %vm484, %v160, 0
    %488 = vmatprep.subr.mxu0 0.0
    %489 = vmatpush1.msra.mxu0 0.0
    %490 = vmatprep.subr.mxu0 0.0
    %491 = vmatpush1.msra.mxu0 0.0
    %492 = vmatprep.subr.mxu0 0.0
    %493 = vmatpush1.msra.mxu0 0.0
    %494 = vmatprep.subr.mxu0 0.0
    %495 = vmatpush1.msra.mxu0 0.0
    %496 = vmatprep.subr.mxu0 0.0
    %497 = vmatpush1.msra.mxu0 0.0
    %498 = vmatprep.subr.mxu0 0.0
    %499 = vmatpush1.msra.mxu0 0.0
    %500 = vmatprep.subr.mxu0 0.0
    %501 = vmatpush1.msra.mxu0 0.0
    %502 = vmatprep.subr.mxu0 0.0
    %503 = vmatpush1.msra.mxu0 0.0
    %504 = vmatprep.subr.mxu0 0.0
    %505 = vmatpush1.msra.mxu0 0.0
    %506 = vmatprep.subr.mxu0 0.0
    %507 = vmatpush1.msra.mxu0 0.0
    %508 = vmatprep.subr.mxu0 0.0
    %509 = vmatpush1.msra.mxu0 0.0
    %510 = vmatprep.subr.mxu0 0.0
    %511 = vmatpush1.msra.mxu0 0.0
    %512 = vmatprep.subr.mxu0 0.0
    %513 = vmatpush1.msra.mxu0 0.0
    %514 = vmatprep.subr.mxu0 0.0
    %515 = vmatpush1.msra.mxu0 0.0
    %516 = vmatprep.subr.mxu0 0.0
    %517 = vmatpush1.msra.mxu0 %v486
    %518 = vmatprep.subr.mxu0 0.0
    %519 = vmatpush1.msra.mxu0 %v159
    %520 = vmatprep.subr.mxu0 0.0
    %521 = vmatpush2.msra.mxu0 0.0
    %522 = vmatprep.subr.mxu0 0.0
    %523 = vmatpush2.msra.mxu0 0.0
    %524 = vmatprep.subr.mxu0 0.0
    %525 = vmatpush2.msra.mxu0 0.0
    %526 = vmatprep.subr.mxu0 0.0
    %527 = vmatpush2.msra.mxu0 0.0
    %528 = vmatprep.subr.mxu0 0.0
    %529 = vmatpush2.msra.mxu0 0.0
    %530 = vmatprep.subr.mxu0 0.0
    %531 = vmatpush2.msra.mxu0 0.0
    %532 = vmatprep.subr.mxu0 0.0
    %533 = vmatpush2.msra.mxu0 0.0
    %534 = vmatprep.subr.mxu0 0.0
    %535 = vmatpush2.msra.mxu0 0.0
    %536 = vmatprep.subr.mxu0 0.0
    %537 = vmatpush2.msra.mxu0 0.0
    %538 = vmatprep.subr.mxu0 0.0
    %539 = vmatpush2.msra.mxu0 0.0
    %540 = vmatprep.subr.mxu0 0.0
    %541 = vmatpush2.msra.mxu0 0.0
    %542 = vmatprep.subr.mxu0 0.0
    %543 = vmatpush2.msra.mxu0 0.0
    %544 = vmatprep.subr.mxu0 0.0
    %545 = vmatpush2.msra.mxu0 0.0
    %546 = vmatprep.subr.mxu0 0.0
    %547 = vmatpush2.msra.mxu0 0.0
    %548 = vmatprep.subr.mxu0 0.0
    %549 = vmatpush2.msra.mxu0 0.0
    %550 = vmatprep.subr.mxu0 0.0
    %551 = vmatpush2.msra.mxu0 0.0
    %552 = vmatprep.mubr.f32.mxu0 0.0
    %553 = vmatmul.mubr.f32.gmra.mxu0 %v482
    %v554 = vpop.f32.mrf.mxu0
    %v555 = vadd.f32 0.0, %v554
    %v556 = vpop.f32.mrf.mxu0
    %557 = vdwg.mxu0
    %v558 = vmul.f32 %v555, %v480
    %v559 = vsel %vm460, %v558, 0.0
    %560 = vadd.xlane.f32.xlu0 %v559
    %v561 = vpop.xlane.xlu0 %560
    %v562 = vmax.f32 %v561, 0.0
    %v563 = vrsqrt.pop %v562
    %v564 = vmul.f32 %v562, %v563
    %vm565 = vcmp.eq.f32.partialorder %v562, inf
    %v566 = vsel %vm565, %v562, %v564
    %vm567 = vcmp.eq.f32.partialorder %v562, 0.0
    %v568 = vand.u32 %v562, 2147483648
    %v569 = vsel %vm567, %v568, %v566
    %v570 = vadd.f32 %v569, 1e-08
    %v571 = vrcp.pop %v570
    %v572 = vmul.f32 0.1, %v571
    %v573 = vsel %vm460, %v456, -inf
    %574 = vmax.xlane.f32.xlu0 %v573
    %v575 = vpop.xlane.xlu0 %574
    %v576 = vsub.f32 %v456, %v575
    %v577 = vmul.f32 %v576, 1.442695
    %v578 = vpow.pop %v577
    %v579 = vsel %vm460, %v578, 0.0
    %580 = vadd.xlane.f32.xlu0 %v579
    %v581 = vpop.xlane.xlu0 %580
    %v582 = vlog2.pop %v581
    %v583 = vmul.f32 %v582, 0.6931472
    %v584 = vadd.f32 %v575, %v583
    %v585 = vsub.f32 %v584, %v476
    %v586 = vmul.f32 %v572, %v555
    %v587 = vadd.f32 %v456, %v586
    %v588 = vsel %vm460, %v587, -inf
    %589 = vmax.xlane.f32.xlu0 %v588
    %v590 = vpop.xlane.xlu0 %589
    %v591 = vsub.f32 %v587, %v590
    %v592 = vmul.f32 %v591, 1.442695
    %v593 = vpow.pop %v592
    %v594 = vsel %vm460, %v593, 0.0
    %595 = vadd.xlane.f32.xlu0 %v594
    %v596 = vpop.xlane.xlu0 %595
    %v597 = vlog2.pop %v596
    %v598 = vmul.f32 %v597, 0.6931472
    %v599 = vadd.f32 %v590, %v598
    %v600 = vmul.f32 %v587, %v172
    %v601 = vsel %vm460, %v600, 0.0
    %602 = vadd.xlane.f32.xlu0 %v601
    %v603 = vpop.xlane.xlu0 %602
    %v604 = vsub.f32 %v599, %v603
    %s605 = smul.u32 0, 8
    %v606 = vlaneseq
    %v607 = vshrl.u32 %v606, 7
    %v608 = vstv %s605
    %v609 = vadd.s32 %v608, %v607
    %vm610 = vcmp.lt.s32.totalorder %v609, 2
    %v611 = vsel %vm610, 1, 0
    %v612 = vcvt.s32.f32 %v611
    %vm613 = vcmp.lt.s32.totalorder %v609, 1
    %v614 = vsel %vm613, 1, 0
    %v615 = vcvt.s32.f32 %v614
    %v616 = vmul.f32 %v585, %v612
    %vm617 = vcmask 7168
    %v618 = vsel %vm617, %v616, 0.0
    %619 = vadd.xlane.f32.xlu0 %v618
    %v620 = vpop.xlane.xlu0 %619
    %v621 = vrot.slane %v620, 4
    %v622 = vadd.f32 %v620, %v621
    %v623 = vrot.slane %v622, 2
    %v624 = vadd.f32 %v622, %v623
    %v625 = vrot.slane %v624, 1
    %v626 = vadd.f32 %v624, %v625
    %s627 = vtos %v626
    %v628 = vmul.f32 %v604, %v615
    %v629 = vsel %vm617, %v628, 0.0
    %630 = vadd.xlane.f32.xlu0 %v629
    %v631 = vpop.xlane.xlu0 %630
    %v632 = vrot.slane %v631, 4
    %v633 = vadd.f32 %v631, %v632
    %v634 = vrot.slane %v633, 2
    %v635 = vadd.f32 %v633, %v634
    %v636 = vrot.slane %v635, 1
    %v637 = vadd.f32 %v635, %v636
    %s638 = vtos %v637
    %v639 = vmul.f32 %v569, 0.1
    %v640 = vadd.f32 %v477, %v639
    %v641 = vmul.f32 %v640, %v612
    %v642 = vsel %vm617, %v641, 0.0
    %643 = vadd.xlane.f32.xlu0 %v642
    %v644 = vpop.xlane.xlu0 %643
    %v645 = vrot.slane %v644, 4
    %v646 = vadd.f32 %v644, %v645
    %v647 = vrot.slane %v646, 2
    %v648 = vadd.f32 %v646, %v647
    %v649 = vrot.slane %v648, 1
    %v650 = vadd.f32 %v648, %v649
    %s651 = vtos %v650
    %vm652 = vcmp.eq.s32.totalorder %v607, 0
    %vm653 = vcmp.eq.s32.totalorder %v162, 0
    %vm654 = vmand %vm652, %vm653
    %v655 = vsel %vm654, 1, 0
    %v656 = vcvt.s32.f32 %v655
    %v657 = vstv %s627
    %v658 = vmul.f32 %v656, %v657
    %vm659 = vcmp.eq.s32.totalorder %v162, 1
    %vm660 = vmand %vm652, %vm659
    %v661 = vsel %vm660, 1, 0
    %v662 = vcvt.s32.f32 %v661
    %v663 = vstv %s638
    %v664 = vmul.f32 %v662, %v663
    %v665 = vadd.f32 %v658, %v664
    %vm666 = vcmp.eq.s32.totalorder %v162, 2
    %vm667 = vmand %vm652, %vm666
    %v668 = vsel %vm667, 1, 0
    %v669 = vcvt.s32.f32 %v668
    %v670 = vstv %s651
    %v671 = vmul.f32 %v669, %v670
    %v672 = vadd.f32 %v665, %v671
    %673 = vst [vmem:[#allocation2] sm:$0xff] %v672
    // Predicated region
    $region22: #{tpu_custom_call.1} parent=1 // pred_check
      _
    $region23: #{tpu_custom_call.1} parent=1 // pred_check_branch
      %675 = sbr.rel (0) target = $region25
    $region24: #{tpu_custom_call.1} parent=1 // pred_region
      %s677 = ssub.s32 128, 128
      %678 = vsyncadd [#allocation3], %s677
      %s680 = sshll.u32 [#allocation2], 4
      %s681 = int_to_ptr.vmem [resolvable:$true] %s680
      %683 = dma.vmem_to_hbm [thread:$0]  %s681, 128, %s5, [#allocation3]
    $region25: #{tpu_custom_call.1} parent=1 // pred_fallthru
      _
    // Predicated region
    $region26: #{tpu_custom_call.1} parent=1 // pred_check
      _
    $region27: #{tpu_custom_call.1} parent=1 // pred_check_branch
      %685 = sbr.rel (0) target = $region29
    $region28: #{tpu_custom_call.1} parent=1 // pred_region
      %686 = dma.done [#allocation3], 128
    $region29: #{tpu_custom_call.1} parent=1 // pred_fallthru
      _
    %687 = vsyncpa [#allocation3], 1

</llo_original>
